<compile_context>
chip_gen: v7x
topology: tpu7x:2x2x1
jax: 0.10.0
libtpu: 0.0.40
codegen_flags: <defaults>
</compile_context>

<pallas_src>
import math

import jax
import jax.numpy as jnp
from jax.experimental import pallas as pl
from jax.experimental.pallas import tpu as pltpu


def _round_up(x, m):
    return (x + m - 1) // m * m


def _largest_divisor_leq(n, cap):
    for d in range(min(n, cap), 0, -1):
        if n % d == 0:
            return d
    return 1


def _vmem_capacity_bytes():
    # Generation-aware physical VMEM (v5e/v6e: 128 MiB, v7x: 64 MiB per TC).
    try:
        return max(int(pltpu.get_tpu_info().vmem_capacity_bytes),
                   48 * 1024 * 1024)
    except Exception:
        return 64 * 1024 * 1024  # conservative (v7x-sized) fallback


def open_conv_layer(x, weight, bias):
    """Forward pass of OpenConvLayer.

    x:      (N, 1, H, W) float32   (NCHW, single input channel)
    weight: (C, 1, 3, 3) float32   (PyTorch Conv2d weight layout)
    bias:   (C,)         float32
    returns (N, C, H, W) float32
    """
    N, Cin, H, W = x.shape
    assert Cin == 1, "OpenConvLayer has a single input channel"
    C = weight.shape[0]
    Hp, Wp = H + 2, W + 2

    vmem_cap = _vmem_capacity_bytes()
    budget = int(vmem_cap * 0.6)          # headroom for scratch/spills

    # Batch tile (second-minor dim of blocks): <= 8, batch padded to a multiple.
    BN = min(N, 8)
    # Channel tile: major dim of the output block (no layout constraint);
    # largest divisor of C <= 8 avoids channel padding.
    CT = _largest_divisor_leq(C, 8)

    w_flat = weight.reshape(C * 9).astype(jnp.float32)   # all 3x3 taps
    b_flat = bias.reshape(C).astype(jnp.float32)

    use_compact = (W % 128 == 0) or (W >= 256)

    if use_compact:
        # ---- compact path: conv on (BN, Hp, Wp), direct NCHW stores --------
        def fits(bn, ct):
            return 2 * 4 * (bn * Hp * Wp + bn * ct * H * W) <= budget

        while not fits(BN, CT) and CT > 1:
            CT = _largest_divisor_leq(C, CT - 1)
        while not fits(BN, CT) and BN > 1:
            BN = max(1, BN // 2)

        N_pad = _round_up(N, BN)
        x_pad = jnp.pad(x[:, 0].astype(jnp.float32),
                        ((0, N_pad - N), (1, 1), (1, 1)))

        def kernel(w_ref, b_ref, x_ref, o_ref):
            # x_ref: VMEM (BN, Hp, Wp); o_ref: VMEM (BN, CT, H, W)
            c0 = pl.program_id(1) * CT
            for j in range(CT):
                acc = jnp.full((BN, H, W), b_ref[c0 + j], jnp.float32)
                for kh in range(3):
                    for kw in range(3):
                        tap = w_ref[(c0 + j) * 9 + kh * 3 + kw]
                        acc = acc + tap * x_ref[:, kh:kh + H, kw:kw + W]
                # Full (H, W) plane store -> unmasked (channel is a major dim).
                o_ref[:, j] = jnp.maximum(acc, 0.0).astype(o_ref.dtype)

        footprint = 2 * 4 * (BN * Hp * Wp + BN * CT * H * W)
        vmem_limit = int(min(max(footprint + (8 << 20), 32 << 20),
                             int(vmem_cap * 0.85)))

        out = pl.pallas_call(
            kernel,
            out_shape=jax.ShapeDtypeStruct((N_pad, C, H, W), jnp.float32),
            grid_spec=pltpu.PrefetchScalarGridSpec(
                num_scalar_prefetch=0,
                grid=(N_pad // BN, C // CT),
                in_specs=[
                    pl.BlockSpec((C * 9,), lambda n, c: (0,),
                                 memory_space=pltpu.MemorySpace.SMEM),
                    pl.BlockSpec((C,), lambda n, c: (0,),
                                 memory_space=pltpu.MemorySpace.SMEM),
                    pl.BlockSpec((BN, Hp, Wp), lambda n, c: (n, 0, 0)),
                ],
                out_specs=pl.BlockSpec((BN, CT, H, W),
                                       lambda n, c: (n, c, 0, 0)),
            ),
            compiler_params=pltpu.CompilerParams(
                dimension_semantics=("parallel", "parallel"),
                vmem_limit_bytes=vmem_limit),
        )(w_flat, b_flat, x_pad)
        return out[:N]

    # ---- wide-flat path (small / odd W): lane-dense flat-shift conv --------
    Lw = H * Wp                                   # valid flat output length
    # Spatial (lane) tile: multiple of 128, sized so one (BN, TL) f32
    # accumulator stays ~16 vregs.
    TL_max = max(128, (16384 // BN) // 128 * 128)
    TL = min(TL_max, _round_up(Lw, 128))
    Ltiles = -(-Lw // TL)                         # cdiv
    Lw_total = Ltiles * TL                        # lane-padded output length
    Lpad = _round_up(Lw_total + 2 * Wp + 2, 128)  # input flat length (+ halo)

    # Shrink the batch tile if the resident padded input would blow the budget.
    while BN > 1 and 2 * 4 * (BN * Lpad + BN * CT * TL) > budget:
        BN = max(1, BN // 2)

    N_pad = _round_up(N, BN)
    x_pad = jnp.pad(x[:, 0].astype(jnp.float32),
                    ((0, N_pad - N), (1, 1), (1, 1)))
    x_flat = x_pad.reshape(N_pad, Hp * Wp)
    x_flat = jnp.pad(x_flat, ((0, 0), (0, Lpad - Hp * Wp)))

    def kernel(w_ref, b_ref, x_ref, o_ref):
        # w_ref: SMEM (C*9,)       all taps, one DMA for the whole grid
        # b_ref: SMEM (C,)         all biases
        # x_ref: VMEM (BN, Lpad)   resident flattened padded input
        # o_ref: VMEM (CT, BN, TL) channel is a MAJOR dim -> per-channel store
        #                          is a full unmasked (BN, TL) slab.
        c0 = pl.program_id(1) * CT
        if Ltiles == 1:
            lbase = 0                                      # static slices
        else:
            lbase = pl.multiple_of(pl.program_id(2) * TL, 128)
        for j in range(CT):
            # Single live accumulator, initialized to the bias.
            acc = jnp.full((BN, TL), b_ref[c0 + j], jnp.float32)
            for kh in range(3):
                for kw in range(3):
                    tap = w_ref[(c0 + j) * 9 + kh * 3 + kw]
                    slab = x_ref[:, pl.ds(lbase + kh * Wp + kw, TL)]
                    acc = acc + tap * slab
            o_ref[j] = jnp.maximum(acc, 0.0).astype(o_ref.dtype)

    footprint = 2 * 4 * (BN * Lpad + BN * CT * TL)
    vmem_limit = int(min(max(footprint + (8 << 20), 32 << 20),
                         int(vmem_cap * 0.85)))

    out_wide = pl.pallas_call(
        kernel,
        out_shape=jax.ShapeDtypeStruct((C, N_pad, Lw_total), jnp.float32),
        grid_spec=pltpu.PrefetchScalarGridSpec(
            num_scalar_prefetch=0,
            grid=(N_pad // BN, C // CT, Ltiles),
            in_specs=[
                pl.BlockSpec((C * 9,), lambda n, c, l: (0,),
                             memory_space=pltpu.MemorySpace.SMEM),
                pl.BlockSpec((C,), lambda n, c, l: (0,),
                             memory_space=pltpu.MemorySpace.SMEM),
                # input depends only on the batch tile -> fetched once per n
                pl.BlockSpec((BN, Lpad), lambda n, c, l: (n, 0)),
            ],
            out_specs=pl.BlockSpec((CT, BN, TL), lambda n, c, l: (c, n, l)),
        ),
        compiler_params=pltpu.CompilerParams(
            dimension_semantics=("parallel", "parallel", "parallel"),
            vmem_limit_bytes=vmem_limit),
    )(w_flat, b_flat, x_flat)

    # One fused XLA copy: strip batch/lane padding + the 2 junk columns per
    # padded row and transpose to NCHW.
    out = out_wide[:, :N, :Lw].reshape(C, N, H, Wp)[:, :, :, :W]
    return jnp.transpose(out, (1, 0, 2, 3))


def _reference(x, weight, bias):
    # Pure-JAX reference: NCHW conv with padding=1, then ReLU.
    y = jax.lax.conv_general_dilated(
        x.astype(jnp.float32), weight.astype(jnp.float32),
        window_strides=(1, 1), padding=((1, 1), (1, 1)),
        dimension_numbers=("NCHW", "OIHW", "NCHW"))
    y = y + bias.reshape(1, -1, 1, 1)
    return jnp.maximum(y, 0.0)


if __name__ == "__main__":
    key = jax.random.PRNGKey(0)
    k_x, k_w, k_b = jax.random.split(key, 3)

    N, C, H, W = 2, 4, 16, 16
    x = jax.random.normal(k_x, (N, 1, H, W), dtype=jnp.float32)

    # Deterministic init mimicking nn.Conv2d defaults:
    # U(-1/sqrt(fan_in), 1/sqrt(fan_in)), fan_in = 1*3*3.
    fan_in = 1 * 3 * 3
    bound = 1.0 / math.sqrt(fan_in)
    weight = jax.random.uniform(k_w, (C, 1, 3, 3), jnp.float32, -bound, bound)
    bias = jax.random.uniform(k_b, (C,), jnp.float32, -bound, bound)

    out = jax.block_until_ready(open_conv_layer(x, weight, bias))
    ref = jax.block_until_ready(_reference(x, weight, bias))

    assert out.shape == (N, C, H, W)
    assert jnp.allclose(out, ref, atol=1e-5, rtol=1e-5), "mismatch vs reference"

    print("KERNEL_OK")
</pallas_src>

<mosaic_0001>
module attributes {stable_mosaic.version = 11 : i64} {
  func.func @kernel(%arg0: i32, %arg1: i32, %arg2: i32, %arg3: memref<36xf32, #tpu.memory_space<smem>>, %arg4: memref<4xf32, #tpu.memory_space<smem>>, %arg5: memref<2x512xf32, #tpu.memory_space<vmem>>, %arg6: memref<4x2x384xf32, #tpu.memory_space<vmem>>) attributes {dimension_semantics = [#tpu.dimension_semantics<parallel>, #tpu.dimension_semantics<parallel>, #tpu.dimension_semantics<parallel>], iteration_bounds = array<i64: 1, 1, 1>, scalar_prefetch = 0 : i64, scratch_operands = 0 : i64, tpu.core_type = #tpu.core_type<tc>, window_params = [{transform_indices = @transform_0, window_bounds = array<i64: 36>}, {transform_indices = @transform_1, window_bounds = array<i64: 4>}, {transform_indices = @transform_2, window_bounds = array<i64: 2, 512>}, {transform_indices = @transform_3, window_bounds = array<i64: 4, 2, 384>}]} {
    %c4_i32 = arith.constant 4 : i32
    %0 = arith.muli %arg1, %c4_i32 : i32
    %c0_i32 = arith.constant 0 : i32
    %1 = arith.addi %0, %c0_i32 : i32
    %2 = arith.index_cast %1 : i32 to index
    %3 = memref.load %arg4[%2] : memref<4xf32, #tpu.memory_space<smem>>
    %4 = vector.broadcast %3 : f32 to vector<2x384xf32>
    %c0_i32_0 = arith.constant 0 : i32
    %5 = arith.addi %0, %c0_i32_0 : i32
    %c9_i32 = arith.constant 9 : i32
    %6 = arith.muli %5, %c9_i32 : i32
    %c0_i32_1 = arith.constant 0 : i32
    %7 = arith.addi %6, %c0_i32_1 : i32
    %c0_i32_2 = arith.constant 0 : i32
    %8 = arith.addi %7, %c0_i32_2 : i32
    %9 = arith.index_cast %8 : i32 to index
    %10 = memref.load %arg3[%9] : memref<36xf32, #tpu.memory_space<smem>>
    %c0 = arith.constant 0 : index
    %c0_3 = arith.constant 0 : index
    %11 = vector.load %arg5[%c0, %c0_3] : memref<2x512xf32, #tpu.memory_space<vmem>>, vector<2x384xf32>
    %12 = vector.broadcast %10 : f32 to vector<2x384xf32>
    %13 = arith.mulf %12, %11 : vector<2x384xf32>
    %14 = arith.addf %4, %13 : vector<2x384xf32>
    %c0_i32_4 = arith.constant 0 : i32
    %15 = arith.addi %0, %c0_i32_4 : i32
    %c9_i32_5 = arith.constant 9 : i32
    %16 = arith.muli %15, %c9_i32_5 : i32
    %c0_i32_6 = arith.constant 0 : i32
    %17 = arith.addi %16, %c0_i32_6 : i32
    %c1_i32 = arith.constant 1 : i32
    %18 = arith.addi %17, %c1_i32 : i32
    %19 = arith.index_cast %18 : i32 to index
    %20 = memref.load %arg3[%19] : memref<36xf32, #tpu.memory_space<smem>>
    %c0_7 = arith.constant 0 : index
    %c1 = arith.constant 1 : index
    %21 = vector.load %arg5[%c0_7, %c1] : memref<2x512xf32, #tpu.memory_space<vmem>>, vector<2x384xf32>
    %22 = vector.broadcast %20 : f32 to vector<2x384xf32>
    %23 = arith.mulf %22, %21 : vector<2x384xf32>
    %24 = arith.addf %14, %23 : vector<2x384xf32>
    %c0_i32_8 = arith.constant 0 : i32
    %25 = arith.addi %0, %c0_i32_8 : i32
    %c9_i32_9 = arith.constant 9 : i32
    %26 = arith.muli %25, %c9_i32_9 : i32
    %c0_i32_10 = arith.constant 0 : i32
    %27 = arith.addi %26, %c0_i32_10 : i32
    %c2_i32 = arith.constant 2 : i32
    %28 = arith.addi %27, %c2_i32 : i32
    %29 = arith.index_cast %28 : i32 to index
    %30 = memref.load %arg3[%29] : memref<36xf32, #tpu.memory_space<smem>>
    %c0_11 = arith.constant 0 : index
    %c2 = arith.constant 2 : index
    %31 = vector.load %arg5[%c0_11, %c2] : memref<2x512xf32, #tpu.memory_space<vmem>>, vector<2x384xf32>
    %32 = vector.broadcast %30 : f32 to vector<2x384xf32>
    %33 = arith.mulf %32, %31 : vector<2x384xf32>
    %34 = arith.addf %24, %33 : vector<2x384xf32>
    %c0_i32_12 = arith.constant 0 : i32
    %35 = arith.addi %0, %c0_i32_12 : i32
    %c9_i32_13 = arith.constant 9 : i32
    %36 = arith.muli %35, %c9_i32_13 : i32
    %c3_i32 = arith.constant 3 : i32
    %37 = arith.addi %36, %c3_i32 : i32
    %c0_i32_14 = arith.constant 0 : i32
    %38 = arith.addi %37, %c0_i32_14 : i32
    %39 = arith.index_cast %38 : i32 to index
    %40 = memref.load %arg3[%39] : memref<36xf32, #tpu.memory_space<smem>>
    %c0_15 = arith.constant 0 : index
    %c18 = arith.constant 18 : index
    %41 = vector.load %arg5[%c0_15, %c18] : memref<2x512xf32, #tpu.memory_space<vmem>>, vector<2x384xf32>
    %42 = vector.broadcast %40 : f32 to vector<2x384xf32>
    %43 = arith.mulf %42, %41 : vector<2x384xf32>
    %44 = arith.addf %34, %43 : vector<2x384xf32>
    %c0_i32_16 = arith.constant 0 : i32
    %45 = arith.addi %0, %c0_i32_16 : i32
    %c9_i32_17 = arith.constant 9 : i32
    %46 = arith.muli %45, %c9_i32_17 : i32
    %c3_i32_18 = arith.constant 3 : i32
    %47 = arith.addi %46, %c3_i32_18 : i32
    %c1_i32_19 = arith.constant 1 : i32
    %48 = arith.addi %47, %c1_i32_19 : i32
    %49 = arith.index_cast %48 : i32 to index
    %50 = memref.load %arg3[%49] : memref<36xf32, #tpu.memory_space<smem>>
    %c0_20 = arith.constant 0 : index
    %c19 = arith.constant 19 : index
    %51 = vector.load %arg5[%c0_20, %c19] : memref<2x512xf32, #tpu.memory_space<vmem>>, vector<2x384xf32>
    %52 = vector.broadcast %50 : f32 to vector<2x384xf32>
    %53 = arith.mulf %52, %51 : vector<2x384xf32>
    %54 = arith.addf %44, %53 : vector<2x384xf32>
    %c0_i32_21 = arith.constant 0 : i32
    %55 = arith.addi %0, %c0_i32_21 : i32
    %c9_i32_22 = arith.constant 9 : i32
    %56 = arith.muli %55, %c9_i32_22 : i32
    %c3_i32_23 = arith.constant 3 : i32
    %57 = arith.addi %56, %c3_i32_23 : i32
    %c2_i32_24 = arith.constant 2 : i32
    %58 = arith.addi %57, %c2_i32_24 : i32
    %59 = arith.index_cast %58 : i32 to index
    %60 = memref.load %arg3[%59] : memref<36xf32, #tpu.memory_space<smem>>
    %c0_25 = arith.constant 0 : index
    %c20 = arith.constant 20 : index
    %61 = vector.load %arg5[%c0_25, %c20] : memref<2x512xf32, #tpu.memory_space<vmem>>, vector<2x384xf32>
    %62 = vector.broadcast %60 : f32 to vector<2x384xf32>
    %63 = arith.mulf %62, %61 : vector<2x384xf32>
    %64 = arith.addf %54, %63 : vector<2x384xf32>
    %c0_i32_26 = arith.constant 0 : i32
    %65 = arith.addi %0, %c0_i32_26 : i32
    %c9_i32_27 = arith.constant 9 : i32
    %66 = arith.muli %65, %c9_i32_27 : i32
    %c6_i32 = arith.constant 6 : i32
    %67 = arith.addi %66, %c6_i32 : i32
    %c0_i32_28 = arith.constant 0 : i32
    %68 = arith.addi %67, %c0_i32_28 : i32
    %69 = arith.index_cast %68 : i32 to index
    %70 = memref.load %arg3[%69] : memref<36xf32, #tpu.memory_space<smem>>
    %c0_29 = arith.constant 0 : index
    %c36 = arith.constant 36 : index
    %71 = vector.load %arg5[%c0_29, %c36] : memref<2x512xf32, #tpu.memory_space<vmem>>, vector<2x384xf32>
    %72 = vector.broadcast %70 : f32 to vector<2x384xf32>
    %73 = arith.mulf %72, %71 : vector<2x384xf32>
    %74 = arith.addf %64, %73 : vector<2x384xf32>
    %c0_i32_30 = arith.constant 0 : i32
    %75 = arith.addi %0, %c0_i32_30 : i32
    %c9_i32_31 = arith.constant 9 : i32
    %76 = arith.muli %75, %c9_i32_31 : i32
    %c6_i32_32 = arith.constant 6 : i32
    %77 = arith.addi %76, %c6_i32_32 : i32
    %c1_i32_33 = arith.constant 1 : i32
    %78 = arith.addi %77, %c1_i32_33 : i32
    %79 = arith.index_cast %78 : i32 to index
    %80 = memref.load %arg3[%79] : memref<36xf32, #tpu.memory_space<smem>>
    %c0_34 = arith.constant 0 : index
    %c37 = arith.constant 37 : index
    %81 = vector.load %arg5[%c0_34, %c37] : memref<2x512xf32, #tpu.memory_space<vmem>>, vector<2x384xf32>
    %82 = vector.broadcast %80 : f32 to vector<2x384xf32>
    %83 = arith.mulf %82, %81 : vector<2x384xf32>
    %84 = arith.addf %74, %83 : vector<2x384xf32>
    %c0_i32_35 = arith.constant 0 : i32
    %85 = arith.addi %0, %c0_i32_35 : i32
    %c9_i32_36 = arith.constant 9 : i32
    %86 = arith.muli %85, %c9_i32_36 : i32
    %c6_i32_37 = arith.constant 6 : i32
    %87 = arith.addi %86, %c6_i32_37 : i32
    %c2_i32_38 = arith.constant 2 : i32
    %88 = arith.addi %87, %c2_i32_38 : i32
    %89 = arith.index_cast %88 : i32 to index
    %90 = memref.load %arg3[%89] : memref<36xf32, #tpu.memory_space<smem>>
    %c0_39 = arith.constant 0 : index
    %c38 = arith.constant 38 : index
    %91 = vector.load %arg5[%c0_39, %c38] : memref<2x512xf32, #tpu.memory_space<vmem>>, vector<2x384xf32>
    %92 = vector.broadcast %90 : f32 to vector<2x384xf32>
    %93 = arith.mulf %92, %91 : vector<2x384xf32>
    %94 = arith.addf %84, %93 : vector<2x384xf32>
    %cst = arith.constant 0.000000e+00 : f32
    %95 = vector.broadcast %cst : f32 to vector<2x384xf32>
    %96 = arith.maximumf %94, %95 : vector<2x384xf32>
    %c0_40 = arith.constant 0 : index
    %c0_41 = arith.constant 0 : index
    %c0_42 = arith.constant 0 : index
    %97 = vector.load %arg6[%c0_40, %c0_41, %c0_42] : memref<4x2x384xf32, #tpu.memory_space<vmem>>, vector<1x2x384xf32>
    %98 = vector.shape_cast %97 : vector<1x2x384xf32> to vector<2x384xf32>
    %99 = vector.shape_cast %96 : vector<2x384xf32> to vector<1x2x384xf32>
    tpu.vector_store %arg6[%c0_40, %c0_41, %c0_42], %99 {strides = array<i32>} : memref<4x2x384xf32, #tpu.memory_space<vmem>>, vector<1x2x384xf32>,
    %c1_i32_43 = arith.constant 1 : i32
    %100 = arith.addi %0, %c1_i32_43 : i32
    %101 = arith.index_cast %100 : i32 to index
    %102 = memref.load %arg4[%101] : memref<4xf32, #tpu.memory_space<smem>>
    %103 = vector.broadcast %102 : f32 to vector<2x384xf32>
    %c1_i32_44 = arith.constant 1 : i32
    %104 = arith.addi %0, %c1_i32_44 : i32
    %c9_i32_45 = arith.constant 9 : i32
    %105 = arith.muli %104, %c9_i32_45 : i32
    %c0_i32_46 = arith.constant 0 : i32
    %106 = arith.addi %105, %c0_i32_46 : i32
    %c0_i32_47 = arith.constant 0 : i32
    %107 = arith.addi %106, %c0_i32_47 : i32
    %108 = arith.index_cast %107 : i32 to index
    %109 = memref.load %arg3[%108] : memref<36xf32, #tpu.memory_space<smem>>
    %c0_48 = arith.constant 0 : index
    %c0_49 = arith.constant 0 : index
    %110 = vector.load %arg5[%c0_48, %c0_49] : memref<2x512xf32, #tpu.memory_space<vmem>>, vector<2x384xf32>
    %111 = vector.broadcast %109 : f32 to vector<2x384xf32>
    %112 = arith.mulf %111, %110 : vector<2x384xf32>
    %113 = arith.addf %103, %112 : vector<2x384xf32>
    %c1_i32_50 = arith.constant 1 : i32
    %114 = arith.addi %0, %c1_i32_50 : i32
    %c9_i32_51 = arith.constant 9 : i32
    %115 = arith.muli %114, %c9_i32_51 : i32
    %c0_i32_52 = arith.constant 0 : i32
    %116 = arith.addi %115, %c0_i32_52 : i32
    %c1_i32_53 = arith.constant 1 : i32
    %117 = arith.addi %116, %c1_i32_53 : i32
    %118 = arith.index_cast %117 : i32 to index
    %119 = memref.load %arg3[%118] : memref<36xf32, #tpu.memory_space<smem>>
    %c0_54 = arith.constant 0 : index
    %c1_55 = arith.constant 1 : index
    %120 = vector.load %arg5[%c0_54, %c1_55] : memref<2x512xf32, #tpu.memory_space<vmem>>, vector<2x384xf32>
    %121 = vector.broadcast %119 : f32 to vector<2x384xf32>
    %122 = arith.mulf %121, %120 : vector<2x384xf32>
    %123 = arith.addf %113, %122 : vector<2x384xf32>
    %c1_i32_56 = arith.constant 1 : i32
    %124 = arith.addi %0, %c1_i32_56 : i32
    %c9_i32_57 = arith.constant 9 : i32
    %125 = arith.muli %124, %c9_i32_57 : i32
    %c0_i32_58 = arith.constant 0 : i32
    %126 = arith.addi %125, %c0_i32_58 : i32
    %c2_i32_59 = arith.constant 2 : i32
    %127 = arith.addi %126, %c2_i32_59 : i32
    %128 = arith.index_cast %127 : i32 to index
    %129 = memref.load %arg3[%128] : memref<36xf32, #tpu.memory_space<smem>>
    %c0_60 = arith.constant 0 : index
    %c2_61 = arith.constant 2 : index
    %130 = vector.load %arg5[%c0_60, %c2_61] : memref<2x512xf32, #tpu.memory_space<vmem>>, vector<2x384xf32>
    %131 = vector.broadcast %129 : f32 to vector<2x384xf32>
    %132 = arith.mulf %131, %130 : vector<2x384xf32>
    %133 = arith.addf %123, %132 : vector<2x384xf32>
    %c1_i32_62 = arith.constant 1 : i32
    %134 = arith.addi %0, %c1_i32_62 : i32
    %c9_i32_63 = arith.constant 9 : i32
    %135 = arith.muli %134, %c9_i32_63 : i32
    %c3_i32_64 = arith.constant 3 : i32
    %136 = arith.addi %135, %c3_i32_64 : i32
    %c0_i32_65 = arith.constant 0 : i32
    %137 = arith.addi %136, %c0_i32_65 : i32
    %138 = arith.index_cast %137 : i32 to index
    %139 = memref.load %arg3[%138] : memref<36xf32, #tpu.memory_space<smem>>
    %c0_66 = arith.constant 0 : index
    %c18_67 = arith.constant 18 : index
    %140 = vector.load %arg5[%c0_66, %c18_67] : memref<2x512xf32, #tpu.memory_space<vmem>>, vector<2x384xf32>
    %141 = vector.broadcast %139 : f32 to vector<2x384xf32>
    %142 = arith.mulf %141, %140 : vector<2x384xf32>
    %143 = arith.addf %133, %142 : vector<2x384xf32>
    %c1_i32_68 = arith.constant 1 : i32
    %144 = arith.addi %0, %c1_i32_68 : i32
    %c9_i32_69 = arith.constant 9 : i32
    %145 = arith.muli %144, %c9_i32_69 : i32
    %c3_i32_70 = arith.constant 3 : i32
    %146 = arith.addi %145, %c3_i32_70 : i32
    %c1_i32_71 = arith.constant 1 : i32
    %147 = arith.addi %146, %c1_i32_71 : i32
    %148 = arith.index_cast %147 : i32 to index
    %149 = memref.load %arg3[%148] : memref<36xf32, #tpu.memory_space<smem>>
    %c0_72 = arith.constant 0 : index
    %c19_73 = arith.constant 19 : index
    %150 = vector.load %arg5[%c0_72, %c19_73] : memref<2x512xf32, #tpu.memory_space<vmem>>, vector<2x384xf32>
    %151 = vector.broadcast %149 : f32 to vector<2x384xf32>
    %152 = arith.mulf %151, %150 : vector<2x384xf32>
    %153 = arith.addf %143, %152 : vector<2x384xf32>
    %c1_i32_74 = arith.constant 1 : i32
    %154 = arith.addi %0, %c1_i32_74 : i32
    %c9_i32_75 = arith.constant 9 : i32
    %155 = arith.muli %154, %c9_i32_75 : i32
    %c3_i32_76 = arith.constant 3 : i32
    %156 = arith.addi %155, %c3_i32_76 : i32
    %c2_i32_77 = arith.constant 2 : i32
    %157 = arith.addi %156, %c2_i32_77 : i32
    %158 = arith.index_cast %157 : i32 to index
    %159 = memref.load %arg3[%158] : memref<36xf32, #tpu.memory_space<smem>>
    %c0_78 = arith.constant 0 : index
    %c20_79 = arith.constant 20 : index
    %160 = vector.load %arg5[%c0_78, %c20_79] : memref<2x512xf32, #tpu.memory_space<vmem>>, vector<2x384xf32>
    %161 = vector.broadcast %159 : f32 to vector<2x384xf32>
    %162 = arith.mulf %161, %160 : vector<2x384xf32>
    %163 = arith.addf %153, %162 : vector<2x384xf32>
    %c1_i32_80 = arith.constant 1 : i32
    %164 = arith.addi %0, %c1_i32_80 : i32
    %c9_i32_81 = arith.constant 9 : i32
    %165 = arith.muli %164, %c9_i32_81 : i32
    %c6_i32_82 = arith.constant 6 : i32
    %166 = arith.addi %165, %c6_i32_82 : i32
    %c0_i32_83 = arith.constant 0 : i32
    %167 = arith.addi %166, %c0_i32_83 : i32
    %168 = arith.index_cast %167 : i32 to index
    %169 = memref.load %arg3[%168] : memref<36xf32, #tpu.memory_space<smem>>
    %c0_84 = arith.constant 0 : index
    %c36_85 = arith.constant 36 : index
    %170 = vector.load %arg5[%c0_84, %c36_85] : memref<2x512xf32, #tpu.memory_space<vmem>>, vector<2x384xf32>
    %171 = vector.broadcast %169 : f32 to vector<2x384xf32>
    %172 = arith.mulf %171, %170 : vector<2x384xf32>
    %173 = arith.addf %163, %172 : vector<2x384xf32>
    %c1_i32_86 = arith.constant 1 : i32
    %174 = arith.addi %0, %c1_i32_86 : i32
    %c9_i32_87 = arith.constant 9 : i32
    %175 = arith.muli %174, %c9_i32_87 : i32
    %c6_i32_88 = arith.constant 6 : i32
    %176 = arith.addi %175, %c6_i32_88 : i32
    %c1_i32_89 = arith.constant 1 : i32
    %177 = arith.addi %176, %c1_i32_89 : i32
    %178 = arith.index_cast %177 : i32 to index
    %179 = memref.load %arg3[%178] : memref<36xf32, #tpu.memory_space<smem>>
    %c0_90 = arith.constant 0 : index
    %c37_91 = arith.constant 37 : index
    %180 = vector.load %arg5[%c0_90, %c37_91] : memref<2x512xf32, #tpu.memory_space<vmem>>, vector<2x384xf32>
    %181 = vector.broadcast %179 : f32 to vector<2x384xf32>
    %182 = arith.mulf %181, %180 : vector<2x384xf32>
    %183 = arith.addf %173, %182 : vector<2x384xf32>
    %c1_i32_92 = arith.constant 1 : i32
    %184 = arith.addi %0, %c1_i32_92 : i32
    %c9_i32_93 = arith.constant 9 : i32
    %185 = arith.muli %184, %c9_i32_93 : i32
    %c6_i32_94 = arith.constant 6 : i32
    %186 = arith.addi %185, %c6_i32_94 : i32
    %c2_i32_95 = arith.constant 2 : i32
    %187 = arith.addi %186, %c2_i32_95 : i32
    %188 = arith.index_cast %187 : i32 to index
    %189 = memref.load %arg3[%188] : memref<36xf32, #tpu.memory_space<smem>>
    %c0_96 = arith.constant 0 : index
    %c38_97 = arith.constant 38 : index
    %190 = vector.load %arg5[%c0_96, %c38_97] : memref<2x512xf32, #tpu.memory_space<vmem>>, vector<2x384xf32>
    %191 = vector.broadcast %189 : f32 to vector<2x384xf32>
    %192 = arith.mulf %191, %190 : vector<2x384xf32>
    %193 = arith.addf %183, %192 : vector<2x384xf32>
    %cst_98 = arith.constant 0.000000e+00 : f32
    %194 = vector.broadcast %cst_98 : f32 to vector<2x384xf32>
    %195 = arith.maximumf %193, %194 : vector<2x384xf32>
    %c1_99 = arith.constant 1 : index
    %c0_100 = arith.constant 0 : index
    %c0_101 = arith.constant 0 : index
    %196 = vector.load %arg6[%c1_99, %c0_100, %c0_101] : memref<4x2x384xf32, #tpu.memory_space<vmem>>, vector<1x2x384xf32>
    %197 = vector.shape_cast %196 : vector<1x2x384xf32> to vector<2x384xf32>
    %198 = vector.shape_cast %195 : vector<2x384xf32> to vector<1x2x384xf32>
    tpu.vector_store %arg6[%c1_99, %c0_100, %c0_101], %198 {strides = array<i32>} : memref<4x2x384xf32, #tpu.memory_space<vmem>>, vector<1x2x384xf32>,
    %c2_i32_102 = arith.constant 2 : i32
    %199 = arith.addi %0, %c2_i32_102 : i32
    %200 = arith.index_cast %199 : i32 to index
    %201 = memref.load %arg4[%200] : memref<4xf32, #tpu.memory_space<smem>>
    %202 = vector.broadcast %201 : f32 to vector<2x384xf32>
    %c2_i32_103 = arith.constant 2 : i32
    %203 = arith.addi %0, %c2_i32_103 : i32
    %c9_i32_104 = arith.constant 9 : i32
    %204 = arith.muli %203, %c9_i32_104 : i32
    %c0_i32_105 = arith.constant 0 : i32
    %205 = arith.addi %204, %c0_i32_105 : i32
    %c0_i32_106 = arith.constant 0 : i32
    %206 = arith.addi %205, %c0_i32_106 : i32
    %207 = arith.index_cast %206 : i32 to index
    %208 = memref.load %arg3[%207] : memref<36xf32, #tpu.memory_space<smem>>
    %c0_107 = arith.constant 0 : index
    %c0_108 = arith.constant 0 : index
    %209 = vector.load %arg5[%c0_107, %c0_108] : memref<2x512xf32, #tpu.memory_space<vmem>>, vector<2x384xf32>
    %210 = vector.broadcast %208 : f32 to vector<2x384xf32>
    %211 = arith.mulf %210, %209 : vector<2x384xf32>
    %212 = arith.addf %202, %211 : vector<2x384xf32>
    %c2_i32_109 = arith.constant 2 : i32
    %213 = arith.addi %0, %c2_i32_109 : i32
    %c9_i32_110 = arith.constant 9 : i32
    %214 = arith.muli %213, %c9_i32_110 : i32
    %c0_i32_111 = arith.constant 0 : i32
    %215 = arith.addi %214, %c0_i32_111 : i32
    %c1_i32_112 = arith.constant 1 : i32
    %216 = arith.addi %215, %c1_i32_112 : i32
    %217 = arith.index_cast %216 : i32 to index
    %218 = memref.load %arg3[%217] : memref<36xf32, #tpu.memory_space<smem>>
    %c0_113 = arith.constant 0 : index
    %c1_114 = arith.constant 1 : index
    %219 = vector.load %arg5[%c0_113, %c1_114] : memref<2x512xf32, #tpu.memory_space<vmem>>, vector<2x384xf32>
    %220 = vector.broadcast %218 : f32 to vector<2x384xf32>
    %221 = arith.mulf %220, %219 : vector<2x384xf32>
    %222 = arith.addf %212, %221 : vector<2x384xf32>
    %c2_i32_115 = arith.constant 2 : i32
    %223 = arith.addi %0, %c2_i32_115 : i32
    %c9_i32_116 = arith.constant 9 : i32
    %224 = arith.muli %223, %c9_i32_116 : i32
    %c0_i32_117 = arith.constant 0 : i32
    %225 = arith.addi %224, %c0_i32_117 : i32
    %c2_i32_118 = arith.constant 2 : i32
    %226 = arith.addi %225, %c2_i32_118 : i32
    %227 = arith.index_cast %226 : i32 to index
    %228 = memref.load %arg3[%227] : memref<36xf32, #tpu.memory_space<smem>>
    %c0_119 = arith.constant 0 : index
    %c2_120 = arith.constant 2 : index
    %229 = vector.load %arg5[%c0_119, %c2_120] : memref<2x512xf32, #tpu.memory_space<vmem>>, vector<2x384xf32>
    %230 = vector.broadcast %228 : f32 to vector<2x384xf32>
    %231 = arith.mulf %230, %229 : vector<2x384xf32>
    %232 = arith.addf %222, %231 : vector<2x384xf32>
    %c2_i32_121 = arith.constant 2 : i32
    %233 = arith.addi %0, %c2_i32_121 : i32
    %c9_i32_122 = arith.constant 9 : i32
    %234 = arith.muli %233, %c9_i32_122 : i32
    %c3_i32_123 = arith.constant 3 : i32
    %235 = arith.addi %234, %c3_i32_123 : i32
    %c0_i32_124 = arith.constant 0 : i32
    %236 = arith.addi %235, %c0_i32_124 : i32
    %237 = arith.index_cast %236 : i32 to index
    %238 = memref.load %arg3[%237] : memref<36xf32, #tpu.memory_space<smem>>
    %c0_125 = arith.constant 0 : index
    %c18_126 = arith.constant 18 : index
    %239 = vector.load %arg5[%c0_125, %c18_126] : memref<2x512xf32, #tpu.memory_space<vmem>>, vector<2x384xf32>
    %240 = vector.broadcast %238 : f32 to vector<2x384xf32>
    %241 = arith.mulf %240, %239 : vector<2x384xf32>
    %242 = arith.addf %232, %241 : vector<2x384xf32>
    %c2_i32_127 = arith.constant 2 : i32
    %243 = arith.addi %0, %c2_i32_127 : i32
    %c9_i32_128 = arith.constant 9 : i32
    %244 = arith.muli %243, %c9_i32_128 : i32
    %c3_i32_129 = arith.constant 3 : i32
    %245 = arith.addi %244, %c3_i32_129 : i32
    %c1_i32_130 = arith.constant 1 : i32
    %246 = arith.addi %245, %c1_i32_130 : i32
    %247 = arith.index_cast %246 : i32 to index
    %248 = memref.load %arg3[%247] : memref<36xf32, #tpu.memory_space<smem>>
    %c0_131 = arith.constant 0 : index
    %c19_132 = arith.constant 19 : index
    %249 = vector.load %arg5[%c0_131, %c19_132] : memref<2x512xf32, #tpu.memory_space<vmem>>, vector<2x384xf32>
    %250 = vector.broadcast %248 : f32 to vector<2x384xf32>
    %251 = arith.mulf %250, %249 : vector<2x384xf32>
    %252 = arith.addf %242, %251 : vector<2x384xf32>
    %c2_i32_133 = arith.constant 2 : i32
    %253 = arith.addi %0, %c2_i32_133 : i32
    %c9_i32_134 = arith.constant 9 : i32
    %254 = arith.muli %253, %c9_i32_134 : i32
    %c3_i32_135 = arith.constant 3 : i32
    %255 = arith.addi %254, %c3_i32_135 : i32
    %c2_i32_136 = arith.constant 2 : i32
    %256 = arith.addi %255, %c2_i32_136 : i32
    %257 = arith.index_cast %256 : i32 to index
    %258 = memref.load %arg3[%257] : memref<36xf32, #tpu.memory_space<smem>>
    %c0_137 = arith.constant 0 : index
    %c20_138 = arith.constant 20 : index
    %259 = vector.load %arg5[%c0_137, %c20_138] : memref<2x512xf32, #tpu.memory_space<vmem>>, vector<2x384xf32>
    %260 = vector.broadcast %258 : f32 to vector<2x384xf32>
    %261 = arith.mulf %260, %259 : vector<2x384xf32>
    %262 = arith.addf %252, %261 : vector<2x384xf32>
    %c2_i32_139 = arith.constant 2 : i32
    %263 = arith.addi %0, %c2_i32_139 : i32
    %c9_i32_140 = arith.constant 9 : i32
    %264 = arith.muli %263, %c9_i32_140 : i32
    %c6_i32_141 = arith.constant 6 : i32
    %265 = arith.addi %264, %c6_i32_141 : i32
    %c0_i32_142 = arith.constant 0 : i32
    %266 = arith.addi %265, %c0_i32_142 : i32
    %267 = arith.index_cast %266 : i32 to index
    %268 = memref.load %arg3[%267] : memref<36xf32, #tpu.memory_space<smem>>
    %c0_143 = arith.constant 0 : index
    %c36_144 = arith.constant 36 : index
    %269 = vector.load %arg5[%c0_143, %c36_144] : memref<2x512xf32, #tpu.memory_space<vmem>>, vector<2x384xf32>
    %270 = vector.broadcast %268 : f32 to vector<2x384xf32>
    %271 = arith.mulf %270, %269 : vector<2x384xf32>
    %272 = arith.addf %262, %271 : vector<2x384xf32>
    %c2_i32_145 = arith.constant 2 : i32
    %273 = arith.addi %0, %c2_i32_145 : i32
    %c9_i32_146 = arith.constant 9 : i32
    %274 = arith.muli %273, %c9_i32_146 : i32
    %c6_i32_147 = arith.constant 6 : i32
    %275 = arith.addi %274, %c6_i32_147 : i32
    %c1_i32_148 = arith.constant 1 : i32
    %276 = arith.addi %275, %c1_i32_148 : i32
    %277 = arith.index_cast %276 : i32 to index
    %278 = memref.load %arg3[%277] : memref<36xf32, #tpu.memory_space<smem>>
    %c0_149 = arith.constant 0 : index
    %c37_150 = arith.constant 37 : index
    %279 = vector.load %arg5[%c0_149, %c37_150] : memref<2x512xf32, #tpu.memory_space<vmem>>, vector<2x384xf32>
    %280 = vector.broadcast %278 : f32 to vector<2x384xf32>
    %281 = arith.mulf %280, %279 : vector<2x384xf32>
    %282 = arith.addf %272, %281 : vector<2x384xf32>
    %c2_i32_151 = arith.constant 2 : i32
    %283 = arith.addi %0, %c2_i32_151 : i32
    %c9_i32_152 = arith.constant 9 : i32
    %284 = arith.muli %283, %c9_i32_152 : i32
    %c6_i32_153 = arith.constant 6 : i32
    %285 = arith.addi %284, %c6_i32_153 : i32
    %c2_i32_154 = arith.constant 2 : i32
    %286 = arith.addi %285, %c2_i32_154 : i32
    %287 = arith.index_cast %286 : i32 to index
    %288 = memref.load %arg3[%287] : memref<36xf32, #tpu.memory_space<smem>>
    %c0_155 = arith.constant 0 : index
    %c38_156 = arith.constant 38 : index
    %289 = vector.load %arg5[%c0_155, %c38_156] : memref<2x512xf32, #tpu.memory_space<vmem>>, vector<2x384xf32>
    %290 = vector.broadcast %288 : f32 to vector<2x384xf32>
    %291 = arith.mulf %290, %289 : vector<2x384xf32>
    %292 = arith.addf %282, %291 : vector<2x384xf32>
    %cst_157 = arith.constant 0.000000e+00 : f32
    %293 = vector.broadcast %cst_157 : f32 to vector<2x384xf32>
    %294 = arith.maximumf %292, %293 : vector<2x384xf32>
    %c2_158 = arith.constant 2 : index
    %c0_159 = arith.constant 0 : index
    %c0_160 = arith.constant 0 : index
    %295 = vector.load %arg6[%c2_158, %c0_159, %c0_160] : memref<4x2x384xf32, #tpu.memory_space<vmem>>, vector<1x2x384xf32>
    %296 = vector.shape_cast %295 : vector<1x2x384xf32> to vector<2x384xf32>
    %297 = vector.shape_cast %294 : vector<2x384xf32> to vector<1x2x384xf32>
    tpu.vector_store %arg6[%c2_158, %c0_159, %c0_160], %297 {strides = array<i32>} : memref<4x2x384xf32, #tpu.memory_space<vmem>>, vector<1x2x384xf32>,
    %c3_i32_161 = arith.constant 3 : i32
    %298 = arith.addi %0, %c3_i32_161 : i32
    %299 = arith.index_cast %298 : i32 to index
    %300 = memref.load %arg4[%299] : memref<4xf32, #tpu.memory_space<smem>>
    %301 = vector.broadcast %300 : f32 to vector<2x384xf32>
    %c3_i32_162 = arith.constant 3 : i32
    %302 = arith.addi %0, %c3_i32_162 : i32
    %c9_i32_163 = arith.constant 9 : i32
    %303 = arith.muli %302, %c9_i32_163 : i32
    %c0_i32_164 = arith.constant 0 : i32
    %304 = arith.addi %303, %c0_i32_164 : i32
    %c0_i32_165 = arith.constant 0 : i32
    %305 = arith.addi %304, %c0_i32_165 : i32
    %306 = arith.index_cast %305 : i32 to index
    %307 = memref.load %arg3[%306] : memref<36xf32, #tpu.memory_space<smem>>
    %c0_166 = arith.constant 0 : index
    %c0_167 = arith.constant 0 : index
    %308 = vector.load %arg5[%c0_166, %c0_167] : memref<2x512xf32, #tpu.memory_space<vmem>>, vector<2x384xf32>
    %309 = vector.broadcast %307 : f32 to vector<2x384xf32>
    %310 = arith.mulf %309, %308 : vector<2x384xf32>
    %311 = arith.addf %301, %310 : vector<2x384xf32>
    %c3_i32_168 = arith.constant 3 : i32
    %312 = arith.addi %0, %c3_i32_168 : i32
    %c9_i32_169 = arith.constant 9 : i32
    %313 = arith.muli %312, %c9_i32_169 : i32
    %c0_i32_170 = arith.constant 0 : i32
    %314 = arith.addi %313, %c0_i32_170 : i32
    %c1_i32_171 = arith.constant 1 : i32
    %315 = arith.addi %314, %c1_i32_171 : i32
    %316 = arith.index_cast %315 : i32 to index
    %317 = memref.load %arg3[%316] : memref<36xf32, #tpu.memory_space<smem>>
    %c0_172 = arith.constant 0 : index
    %c1_173 = arith.constant 1 : index
    %318 = vector.load %arg5[%c0_172, %c1_173] : memref<2x512xf32, #tpu.memory_space<vmem>>, vector<2x384xf32>
    %319 = vector.broadcast %317 : f32 to vector<2x384xf32>
    %320 = arith.mulf %319, %318 : vector<2x384xf32>
    %321 = arith.addf %311, %320 : vector<2x384xf32>
    %c3_i32_174 = arith.constant 3 : i32
    %322 = arith.addi %0, %c3_i32_174 : i32
    %c9_i32_175 = arith.constant 9 : i32
    %323 = arith.muli %322, %c9_i32_175 : i32
    %c0_i32_176 = arith.constant 0 : i32
    %324 = arith.addi %323, %c0_i32_176 : i32
    %c2_i32_177 = arith.constant 2 : i32
    %325 = arith.addi %324, %c2_i32_177 : i32
    %326 = arith.index_cast %325 : i32 to index
    %327 = memref.load %arg3[%326] : memref<36xf32, #tpu.memory_space<smem>>
    %c0_178 = arith.constant 0 : index
    %c2_179 = arith.constant 2 : index
    %328 = vector.load %arg5[%c0_178, %c2_179] : memref<2x512xf32, #tpu.memory_space<vmem>>, vector<2x384xf32>
    %329 = vector.broadcast %327 : f32 to vector<2x384xf32>
    %330 = arith.mulf %329, %328 : vector<2x384xf32>
    %331 = arith.addf %321, %330 : vector<2x384xf32>
    %c3_i32_180 = arith.constant 3 : i32
    %332 = arith.addi %0, %c3_i32_180 : i32
    %c9_i32_181 = arith.constant 9 : i32
    %333 = arith.muli %332, %c9_i32_181 : i32
    %c3_i32_182 = arith.constant 3 : i32
    %334 = arith.addi %333, %c3_i32_182 : i32
    %c0_i32_183 = arith.constant 0 : i32
    %335 = arith.addi %334, %c0_i32_183 : i32
    %336 = arith.index_cast %335 : i32 to index
    %337 = memref.load %arg3[%336] : memref<36xf32, #tpu.memory_space<smem>>
    %c0_184 = arith.constant 0 : index
    %c18_185 = arith.constant 18 : index
    %338 = vector.load %arg5[%c0_184, %c18_185] : memref<2x512xf32, #tpu.memory_space<vmem>>, vector<2x384xf32>
    %339 = vector.broadcast %337 : f32 to vector<2x384xf32>
    %340 = arith.mulf %339, %338 : vector<2x384xf32>
    %341 = arith.addf %331, %340 : vector<2x384xf32>
    %c3_i32_186 = arith.constant 3 : i32
    %342 = arith.addi %0, %c3_i32_186 : i32
    %c9_i32_187 = arith.constant 9 : i32
    %343 = arith.muli %342, %c9_i32_187 : i32
    %c3_i32_188 = arith.constant 3 : i32
    %344 = arith.addi %343, %c3_i32_188 : i32
    %c1_i32_189 = arith.constant 1 : i32
    %345 = arith.addi %344, %c1_i32_189 : i32
    %346 = arith.index_cast %345 : i32 to index
    %347 = memref.load %arg3[%346] : memref<36xf32, #tpu.memory_space<smem>>
    %c0_190 = arith.constant 0 : index
    %c19_191 = arith.constant 19 : index
    %348 = vector.load %arg5[%c0_190, %c19_191] : memref<2x512xf32, #tpu.memory_space<vmem>>, vector<2x384xf32>
    %349 = vector.broadcast %347 : f32 to vector<2x384xf32>
    %350 = arith.mulf %349, %348 : vector<2x384xf32>
    %351 = arith.addf %341, %350 : vector<2x384xf32>
    %c3_i32_192 = arith.constant 3 : i32
    %352 = arith.addi %0, %c3_i32_192 : i32
    %c9_i32_193 = arith.constant 9 : i32
    %353 = arith.muli %352, %c9_i32_193 : i32
    %c3_i32_194 = arith.constant 3 : i32
    %354 = arith.addi %353, %c3_i32_194 : i32
    %c2_i32_195 = arith.constant 2 : i32
    %355 = arith.addi %354, %c2_i32_195 : i32
    %356 = arith.index_cast %355 : i32 to index
    %357 = memref.load %arg3[%356] : memref<36xf32, #tpu.memory_space<smem>>
    %c0_196 = arith.constant 0 : index
    %c20_197 = arith.constant 20 : index
    %358 = vector.load %arg5[%c0_196, %c20_197] : memref<2x512xf32, #tpu.memory_space<vmem>>, vector<2x384xf32>
    %359 = vector.broadcast %357 : f32 to vector<2x384xf32>
    %360 = arith.mulf %359, %358 : vector<2x384xf32>
    %361 = arith.addf %351, %360 : vector<2x384xf32>
    %c3_i32_198 = arith.constant 3 : i32
    %362 = arith.addi %0, %c3_i32_198 : i32
    %c9_i32_199 = arith.constant 9 : i32
    %363 = arith.muli %362, %c9_i32_199 : i32
    %c6_i32_200 = arith.constant 6 : i32
    %364 = arith.addi %363, %c6_i32_200 : i32
    %c0_i32_201 = arith.constant 0 : i32
    %365 = arith.addi %364, %c0_i32_201 : i32
    %366 = arith.index_cast %365 : i32 to index
    %367 = memref.load %arg3[%366] : memref<36xf32, #tpu.memory_space<smem>>
    %c0_202 = arith.constant 0 : index
    %c36_203 = arith.constant 36 : index
    %368 = vector.load %arg5[%c0_202, %c36_203] : memref<2x512xf32, #tpu.memory_space<vmem>>, vector<2x384xf32>
    %369 = vector.broadcast %367 : f32 to vector<2x384xf32>
    %370 = arith.mulf %369, %368 : vector<2x384xf32>
    %371 = arith.addf %361, %370 : vector<2x384xf32>
    %c3_i32_204 = arith.constant 3 : i32
    %372 = arith.addi %0, %c3_i32_204 : i32
    %c9_i32_205 = arith.constant 9 : i32
    %373 = arith.muli %372, %c9_i32_205 : i32
    %c6_i32_206 = arith.constant 6 : i32
    %374 = arith.addi %373, %c6_i32_206 : i32
    %c1_i32_207 = arith.constant 1 : i32
    %375 = arith.addi %374, %c1_i32_207 : i32
    %376 = arith.index_cast %375 : i32 to index
    %377 = memref.load %arg3[%376] : memref<36xf32, #tpu.memory_space<smem>>
    %c0_208 = arith.constant 0 : index
    %c37_209 = arith.constant 37 : index
    %378 = vector.load %arg5[%c0_208, %c37_209] : memref<2x512xf32, #tpu.memory_space<vmem>>, vector<2x384xf32>
    %379 = vector.broadcast %377 : f32 to vector<2x384xf32>
    %380 = arith.mulf %379, %378 : vector<2x384xf32>
    %381 = arith.addf %371, %380 : vector<2x384xf32>
    %c3_i32_210 = arith.constant 3 : i32
    %382 = arith.addi %0, %c3_i32_210 : i32
    %c9_i32_211 = arith.constant 9 : i32
    %383 = arith.muli %382, %c9_i32_211 : i32
    %c6_i32_212 = arith.constant 6 : i32
    %384 = arith.addi %383, %c6_i32_212 : i32
    %c2_i32_213 = arith.constant 2 : i32
    %385 = arith.addi %384, %c2_i32_213 : i32
    %386 = arith.index_cast %385 : i32 to index
    %387 = memref.load %arg3[%386] : memref<36xf32, #tpu.memory_space<smem>>
    %c0_214 = arith.constant 0 : index
    %c38_215 = arith.constant 38 : index
    %388 = vector.load %arg5[%c0_214, %c38_215] : memref<2x512xf32, #tpu.memory_space<vmem>>, vector<2x384xf32>
    %389 = vector.broadcast %387 : f32 to vector<2x384xf32>
    %390 = arith.mulf %389, %388 : vector<2x384xf32>
    %391 = arith.addf %381, %390 : vector<2x384xf32>
    %cst_216 = arith.constant 0.000000e+00 : f32
    %392 = vector.broadcast %cst_216 : f32 to vector<2x384xf32>
    %393 = arith.maximumf %391, %392 : vector<2x384xf32>
    %c3 = arith.constant 3 : index
    %c0_217 = arith.constant 0 : index
    %c0_218 = arith.constant 0 : index
    %394 = vector.load %arg6[%c3, %c0_217, %c0_218] : memref<4x2x384xf32, #tpu.memory_space<vmem>>, vector<1x2x384xf32>
    %395 = vector.shape_cast %394 : vector<1x2x384xf32> to vector<2x384xf32>
    %396 = vector.shape_cast %393 : vector<2x384xf32> to vector<1x2x384xf32>
    tpu.vector_store %arg6[%c3, %c0_217, %c0_218], %396 {strides = array<i32>} : memref<4x2x384xf32, #tpu.memory_space<vmem>>, vector<1x2x384xf32>,
    return
  }
  func.func @transform_0(%arg0: i32, %arg1: i32, %arg2: i32) -> i32 {
    %c0_i32 = arith.constant 0 : i32
    %c0_i32_0 = arith.constant 0 : i32
    return %c0_i32 : i32
  }
  func.func @transform_1(%arg0: i32, %arg1: i32, %arg2: i32) -> i32 {
    %c0_i32 = arith.constant 0 : i32
    %c0_i32_0 = arith.constant 0 : i32
    return %c0_i32 : i32
  }
  func.func @transform_2(%arg0: i32, %arg1: i32, %arg2: i32) -> (i32, i32) {
    %c0_i32 = arith.constant 0 : i32
    %c0_i32_0 = arith.constant 0 : i32
    return %arg0, %c0_i32 : i32, i32
  }
  func.func @transform_3(%arg0: i32, %arg1: i32, %arg2: i32) -> (i32, i32, i32) {
    %c0_i32 = arith.constant 0 : i32
    return %arg1, %arg0, %arg2 : i32, i32, i32
  }
}

</mosaic_0001>

<llo_original>
// kernel: tpu_custom_call.1
$region0: #{tpu_custom_call.1}
  #allocation0 [shape = 'u32[]', space=smem, size = 0x4, offset = 0x4, fixed_abs, tag = 'smem constant byte address 0x4 - core index']
  #allocation1 [shape = 'u32[144,128]{1,0:T(1,128)}', space=vmem, size = 0x12000, scoped, tag = 'internal scratch']
  %s0 = inlined_call_operand.hbm [shape: f32[36], index: 0, kind: input, shape index: {}]
  %s1 = inlined_call_operand.vmem [shape: f32[4], index: 1, kind: input, shape index: {}]
  %s2 = inlined_call_operand.hbm [shape: f32[2,512], index: 2, kind: input, shape index: {}]
  %s3 = inlined_call_operand.hbm [shape: f32[4,2,384], index: 3, kind: output, shape index: {}]
  %s4 = sld [smem:[#allocation0]]
  $region34: #{tpu_custom_call.1} parent=0
    _
  %s6 = ssub.s32 1, %s4
  %s7 = scalar_select 0, %s6, %s4
  $region1: #{tpu_custom_call.1} parent=0
    #allocation2 [shape = 'u8[512]{0}', space=smem, size = 0x200, scoped, tag = 'input window, operand 0, single buffered']
    #allocation3 [shape = 's32[1]{0}', space=sflag, size = 0x4, scoped, tag = 'scoped memory for tpu_custom_call.1']
    #allocation4 [shape = 's32[1]{0}', space=sflag, size = 0x4, scoped, tag = 'scoped memory for tpu_custom_call.1']
    #allocation5 [shape = 's32[1]{0}', space=sflag, size = 0x4, scoped, tag = 'scoped memory for tpu_custom_call.1']
    #allocation6 [shape = 's32[1]{0}', space=sflag, size = 0x4, scoped, tag = 'scoped memory for tpu_custom_call.1']
    #allocation7 [shape = 'u8[512]{0}', space=smem, size = 0x200, scoped, tag = 'input window, operand 1, single buffered']
    #allocation8 [shape = 'u8[4096]{0}', space=vmem, size = 0x1000, scoped, tag = 'input window, operand 2, single buffered']
    #allocation9 [shape = 'u8[12288]{0}', space=vmem, size = 0x3000, scoped, tag = 'output window, operand 0, single buffered']
    %8 = vsyncpa [#allocation5], 0
    %9 = vsyncpa [#allocation6], 0
    %10 = vsyncpa [#allocation3], 0
    %11 = vsyncpa [#allocation4], 0
    // Predicated region
    $region2: #{tpu_custom_call.1} parent=1 // pred_check
      _
    $region3: #{tpu_custom_call.1} parent=1 // pred_check_branch
      %13 = sbr.rel (0) target = $region5
    $region4: #{tpu_custom_call.1} parent=1 // pred_region
      %s15 = ssub.s32 16, 16
      %16 = vsyncadd [#allocation5], %s15
      %19 = dma.hbm_to_smem %s0, 16, [#allocation2], [#allocation5]
    $region5: #{tpu_custom_call.1} parent=1 // pred_fallthru
      _
    // Predicated region
    $region6: #{tpu_custom_call.1} parent=1 // pred_check
      _
    $region7: #{tpu_custom_call.1} parent=1 // pred_check_branch
      %21 = sbr.rel (0) target = $region9
    $region8: #{tpu_custom_call.1} parent=1 // pred_region
      %s23 = ssub.s32 16, 16
      %24 = vsyncadd [#allocation6], %s23
      %s26 = sshll.u32 %s1, 4
      %s27 = int_to_ptr.vmem [resolvable:$true] %s26
      %29 = dma.vmem_to_smem %s27, 16, [#allocation7], [#allocation6]
    $region9: #{tpu_custom_call.1} parent=1 // pred_fallthru
      _
    // Predicated region
    $region10: #{tpu_custom_call.1} parent=1 // pred_check
      _
    $region11: #{tpu_custom_call.1} parent=1 // pred_check_branch
      %31 = sbr.rel (0) target = $region13
    $region12: #{tpu_custom_call.1} parent=1 // pred_region
      %s33 = ssub.s32 128, 128
      %34 = vsyncadd [#allocation3], %s33
      %s36 = sshll.u32 [#allocation8], 4
      %s37 = int_to_ptr.vmem [resolvable:$true] %s36
      %39 = dma.hbm_to_vmem [thread:$0]  %s2, 128, %s37, [#allocation3]
    $region13: #{tpu_custom_call.1} parent=1 // pred_fallthru
      _
    // Predicated region
    $region14: #{tpu_custom_call.1} parent=1 // pred_check
      _
    $region15: #{tpu_custom_call.1} parent=1 // pred_check_branch
      %41 = sbr.rel (0) target = $region17
    $region16: #{tpu_custom_call.1} parent=1 // pred_region
      %42 = dma.done [#allocation5], 16
    $region17: #{tpu_custom_call.1} parent=1 // pred_fallthru
      _
    // Predicated region
    $region18: #{tpu_custom_call.1} parent=1 // pred_check
      _
    $region19: #{tpu_custom_call.1} parent=1 // pred_check_branch
      %44 = sbr.rel (0) target = $region21
    $region20: #{tpu_custom_call.1} parent=1 // pred_region
      %45 = dma.done [#allocation6], 16
    $region21: #{tpu_custom_call.1} parent=1 // pred_fallthru
      _
    // Predicated region
    $region22: #{tpu_custom_call.1} parent=1 // pred_check
      _
    $region23: #{tpu_custom_call.1} parent=1 // pred_check_branch
      %47 = sbr.rel (0) target = $region25
    $region24: #{tpu_custom_call.1} parent=1 // pred_region
      %48 = dma.done [#allocation3], 128
    $region25: #{tpu_custom_call.1} parent=1 // pred_fallthru
      _
    %49 = sfence
    %s50 = smul.u32 0, 4
    %s51 = sld [smem:[#allocation7 + %s50]]
    %v52 = vstv %s51
    %s53 = smul.u32 0, 36
    %s54 = sld [smem:[#allocation2 + %s53]]
    %v55 = vld [vmem:[#allocation8] sm:$0x3f]
    %v56 = vstv %s54
    %v57 = vmul.f32 %v56, %v55
    %v58 = vadd.f32 %v52, %v57
    %s59 = sadd.s32 %s53, 1
    %s60 = sld [smem:[#allocation2 + %s59]]
    %v61 = vld [vmem:[#allocation8] sm:$0xff]
    %v62 = vstv %s60
    %v63 = vmul.f32 %v62, %v61
    %65 = vrot.lane.b32.xlu0 %v63, 127
    %v66 = vpop.permute.xlu0 %65
    %v67 = vrot.slane %v66, 2
    %vm68 = vcmask 1039360
    %v69 = vsel %vm68, %v66, %v67
    %v71 = vadd.f32 %v58, %v69
    %s72 = sadd.s32 %s53, 2
    %s73 = sld [smem:[#allocation2 + %s72]]
    %v74 = vstv %s73
    %v75 = vmul.f32 %v74, %v61
    %77 = vrot.lane.b32.xlu0 %v75, 126
    %v78 = vpop.permute.xlu0 %77
    %v79 = vrot.slane %v78, 2
    %vm80 = vcmask 1031168
    %v81 = vsel %vm80, %v78, %v79
    %v83 = vadd.f32 %v71, %v81
    %s84 = sadd.s32 %s53, 3
    %s85 = sld [smem:[#allocation2 + %s84]]
    %v86 = vstv %s85
    %v87 = vmul.f32 %v86, %v61
    %89 = vrot.lane.b32.xlu0 %v87, 110
    %v90 = vpop.permute.xlu0 %89
    %v91 = vrot.slane %v90, 2
    %vm92 = vcmask 900096
    %v93 = vsel %vm92, %v90, %v91
    %v95 = vadd.f32 %v83, %v93
    %s96 = sadd.s32 %s53, 4
    %s97 = sld [smem:[#allocation2 + %s96]]
    %v98 = vstv %s97
    %v99 = vmul.f32 %v98, %v61
    %101 = vrot.lane.b32.xlu0 %v99, 109
    %v102 = vpop.permute.xlu0 %101
    %v103 = vrot.slane %v102, 2
    %vm104 = vcmask 891904
    %v105 = vsel %vm104, %v102, %v103
    %v107 = vadd.f32 %v95, %v105
    %s108 = sadd.s32 %s53, 5
    %s109 = sld [smem:[#allocation2 + %s108]]
    %v110 = vstv %s109
    %v111 = vmul.f32 %v110, %v61
    %113 = vrot.lane.b32.xlu0 %v111, 108
    %v114 = vpop.permute.xlu0 %113
    %v115 = vrot.slane %v114, 2
    %vm116 = vcmask 883712
    %v117 = vsel %vm116, %v114, %v115
    %v119 = vadd.f32 %v107, %v117
    %s120 = sadd.s32 %s53, 6
    %s121 = sld [smem:[#allocation2 + %s120]]
    %v122 = vstv %s121
    %v123 = vmul.f32 %v122, %v61
    %125 = vrot.lane.b32.xlu0 %v123, 92
    %v126 = vpop.permute.xlu0 %125
    %v127 = vrot.slane %v126, 2
    %vm128 = vcmask 752640
    %v129 = vsel %vm128, %v126, %v127
    %v131 = vadd.f32 %v119, %v129
    %s132 = sadd.s32 %s53, 7
    %s133 = sld [smem:[#allocation2 + %s132]]
    %v134 = vstv %s133
    %v135 = vmul.f32 %v134, %v61
    %137 = vrot.lane.b32.xlu0 %v135, 91
    %v138 = vpop.permute.xlu0 %137
    %v139 = vrot.slane %v138, 2
    %vm140 = vcmask 744448
    %v141 = vsel %vm140, %v138, %v139
    %v143 = vadd.f32 %v131, %v141
    %s144 = sadd.s32 %s53, 8
    %s145 = sld [smem:[#allocation2 + %s144]]
    %v146 = vstv %s145
    %v147 = vmul.f32 %v146, %v61
    %149 = vrot.lane.b32.xlu0 %v147, 90
    %v150 = vpop.permute.xlu0 %149
    %v151 = vrot.slane %v150, 2
    %vm152 = vcmask 736256
    %v153 = vsel %vm152, %v150, %v151
    %v155 = vadd.f32 %v143, %v153
    %v156 = vmax.f32 %v155, 0.0
    %157 = vst [vmem:[#allocation9] sm:$0x3f] %v156
    %s158 = sadd.s32 %s50, 1
    %s159 = sld [smem:[#allocation7 + %s158]]
    %v160 = vstv %s159
    %s161 = smul.u32 %s158, 9
    %s162 = sld [smem:[#allocation2 + %s161]]
    %v163 = vld [vmem:[#allocation8] sm:$0x3f]
    %v164 = vstv %s162
    %v165 = vmul.f32 %v164, %v163
    %v166 = vadd.f32 %v160, %v165
    %s167 = sadd.s32 %s161, 1
    %s168 = sld [smem:[#allocation2 + %s167]]
    %v169 = vld [vmem:[#allocation8] sm:$0xff]
    %v170 = vstv %s168
    %v171 = vmul.f32 %v170, %v169
    %173 = vrot.lane.b32.xlu0 %v171, 127
    %v174 = vpop.permute.xlu0 %173
    %v175 = vrot.slane %v174, 2
    %v176 = vsel %vm68, %v174, %v175
    %v178 = vadd.f32 %v166, %v176
    %s179 = sadd.s32 %s161, 2
    %s180 = sld [smem:[#allocation2 + %s179]]
    %v181 = vstv %s180
    %v182 = vmul.f32 %v181, %v169
    %184 = vrot.lane.b32.xlu0 %v182, 126
    %v185 = vpop.permute.xlu0 %184
    %v186 = vrot.slane %v185, 2
    %v187 = vsel %vm80, %v185, %v186
    %v189 = vadd.f32 %v178, %v187
    %s190 = sadd.s32 %s161, 3
    %s191 = sld [smem:[#allocation2 + %s190]]
    %v192 = vstv %s191
    %v193 = vmul.f32 %v192, %v169
    %195 = vrot.lane.b32.xlu0 %v193, 110
    %v196 = vpop.permute.xlu0 %195
    %v197 = vrot.slane %v196, 2
    %v198 = vsel %vm92, %v196, %v197
    %v200 = vadd.f32 %v189, %v198
    %s201 = sadd.s32 %s161, 4
    %s202 = sld [smem:[#allocation2 + %s201]]
    %v203 = vstv %s202
    %v204 = vmul.f32 %v203, %v169
    %206 = vrot.lane.b32.xlu0 %v204, 109
    %v207 = vpop.permute.xlu0 %206
    %v208 = vrot.slane %v207, 2
    %v209 = vsel %vm104, %v207, %v208
    %v211 = vadd.f32 %v200, %v209
    %s212 = sadd.s32 %s161, 5
    %s213 = sld [smem:[#allocation2 + %s212]]
    %v214 = vstv %s213
    %v215 = vmul.f32 %v214, %v169
    %217 = vrot.lane.b32.xlu0 %v215, 108
    %v218 = vpop.permute.xlu0 %217
    %v219 = vrot.slane %v218, 2
    %v220 = vsel %vm116, %v218, %v219
    %v222 = vadd.f32 %v211, %v220
    %s223 = sadd.s32 %s161, 6
    %s224 = sld [smem:[#allocation2 + %s223]]
    %v225 = vstv %s224
    %v226 = vmul.f32 %v225, %v169
    %228 = vrot.lane.b32.xlu0 %v226, 92
    %v229 = vpop.permute.xlu0 %228
    %v230 = vrot.slane %v229, 2
    %v231 = vsel %vm128, %v229, %v230
    %v233 = vadd.f32 %v222, %v231
    %s234 = sadd.s32 %s161, 7
    %s235 = sld [smem:[#allocation2 + %s234]]
    %v236 = vstv %s235
    %v237 = vmul.f32 %v236, %v169
    %239 = vrot.lane.b32.xlu0 %v237, 91
    %v240 = vpop.permute.xlu0 %239
    %v241 = vrot.slane %v240, 2
    %v242 = vsel %vm140, %v240, %v241
    %v244 = vadd.f32 %v233, %v242
    %s245 = sadd.s32 %s161, 8
    %s246 = sld [smem:[#allocation2 + %s245]]
    %v247 = vstv %s246
    %v248 = vmul.f32 %v247, %v169
    %250 = vrot.lane.b32.xlu0 %v248, 90
    %v251 = vpop.permute.xlu0 %250
    %v252 = vrot.slane %v251, 2
    %v253 = vsel %vm152, %v251, %v252
    %v255 = vadd.f32 %v244, %v253
    %v256 = vmax.f32 %v255, 0.0
    %s257 = scalar_lea.vmem [#allocation9], 6
    %258 = vst [vmem:[%s257] sm:$0x3f] %v256
    %s259 = sadd.s32 %s50, 2
    %s260 = sld [smem:[#allocation7 + %s259]]
    %v261 = vstv %s260
    %s262 = smul.u32 %s259, 9
    %s263 = sld [smem:[#allocation2 + %s262]]
    %v264 = vld [vmem:[#allocation8] sm:$0x3f]
    %v265 = vstv %s263
    %v266 = vmul.f32 %v265, %v264
    %v267 = vadd.f32 %v261, %v266
    %s268 = sadd.s32 %s262, 1
    %s269 = sld [smem:[#allocation2 + %s268]]
    %v270 = vld [vmem:[#allocation8] sm:$0xff]
    %v271 = vstv %s269
    %v272 = vmul.f32 %v271, %v270
    %274 = vrot.lane.b32.xlu0 %v272, 127
    %v275 = vpop.permute.xlu0 %274
    %v276 = vrot.slane %v275, 2
    %v277 = vsel %vm68, %v275, %v276
    %v279 = vadd.f32 %v267, %v277
    %s280 = sadd.s32 %s262, 2
    %s281 = sld [smem:[#allocation2 + %s280]]
    %v282 = vstv %s281
    %v283 = vmul.f32 %v282, %v270
    %285 = vrot.lane.b32.xlu0 %v283, 126
    %v286 = vpop.permute.xlu0 %285
    %v287 = vrot.slane %v286, 2
    %v288 = vsel %vm80, %v286, %v287
    %v290 = vadd.f32 %v279, %v288
    %s291 = sadd.s32 %s262, 3
    %s292 = sld [smem:[#allocation2 + %s291]]
    %v293 = vstv %s292
    %v294 = vmul.f32 %v293, %v270
    %296 = vrot.lane.b32.xlu0 %v294, 110
    %v297 = vpop.permute.xlu0 %296
    %v298 = vrot.slane %v297, 2
    %v299 = vsel %vm92, %v297, %v298
    %v301 = vadd.f32 %v290, %v299
    %s302 = sadd.s32 %s262, 4
    %s303 = sld [smem:[#allocation2 + %s302]]
    %v304 = vstv %s303
    %v305 = vmul.f32 %v304, %v270
    %307 = vrot.lane.b32.xlu0 %v305, 109
    %v308 = vpop.permute.xlu0 %307
    %v309 = vrot.slane %v308, 2
    %v310 = vsel %vm104, %v308, %v309
    %v312 = vadd.f32 %v301, %v310
    %s313 = sadd.s32 %s262, 5
    %s314 = sld [smem:[#allocation2 + %s313]]
    %v315 = vstv %s314
    %v316 = vmul.f32 %v315, %v270
    %318 = vrot.lane.b32.xlu0 %v316, 108
    %v319 = vpop.permute.xlu0 %318
    %v320 = vrot.slane %v319, 2
    %v321 = vsel %vm116, %v319, %v320
    %v323 = vadd.f32 %v312, %v321
    %s324 = sadd.s32 %s262, 6
    %s325 = sld [smem:[#allocation2 + %s324]]
    %v326 = vstv %s325
    %v327 = vmul.f32 %v326, %v270
    %329 = vrot.lane.b32.xlu0 %v327, 92
    %v330 = vpop.permute.xlu0 %329
    %v331 = vrot.slane %v330, 2
    %v332 = vsel %vm128, %v330, %v331
    %v334 = vadd.f32 %v323, %v332
    %s335 = sadd.s32 %s262, 7
    %s336 = sld [smem:[#allocation2 + %s335]]
    %v337 = vstv %s336
    %v338 = vmul.f32 %v337, %v270
    %340 = vrot.lane.b32.xlu0 %v338, 91
    %v341 = vpop.permute.xlu0 %340
    %v342 = vrot.slane %v341, 2
    %v343 = vsel %vm140, %v341, %v342
    %v345 = vadd.f32 %v334, %v343
    %s346 = sadd.s32 %s262, 8
    %s347 = sld [smem:[#allocation2 + %s346]]
    %v348 = vstv %s347
    %v349 = vmul.f32 %v348, %v270
    %351 = vrot.lane.b32.xlu0 %v349, 90
    %v352 = vpop.permute.xlu0 %351
    %v353 = vrot.slane %v352, 2
    %v354 = vsel %vm152, %v352, %v353
    %v356 = vadd.f32 %v345, %v354
    %v357 = vmax.f32 %v356, 0.0
    %s358 = scalar_lea.vmem [#allocation9], 12
    %359 = vst [vmem:[%s358] sm:$0x3f] %v357
    %s360 = sadd.s32 %s50, 3
    %s361 = sld [smem:[#allocation7 + %s360]]
    %v362 = vstv %s361
    %s363 = smul.u32 %s360, 9
    %s364 = sld [smem:[#allocation2 + %s363]]
    %v365 = vld [vmem:[#allocation8] sm:$0x3f]
    %v366 = vstv %s364
    %v367 = vmul.f32 %v366, %v365
    %v368 = vadd.f32 %v362, %v367
    %s369 = sadd.s32 %s363, 1
    %s370 = sld [smem:[#allocation2 + %s369]]
    %v371 = vld [vmem:[#allocation8] sm:$0xff]
    %v372 = vstv %s370
    %v373 = vmul.f32 %v372, %v371
    %375 = vrot.lane.b32.xlu0 %v373, 127
    %v376 = vpop.permute.xlu0 %375
    %v377 = vrot.slane %v376, 2
    %v378 = vsel %vm68, %v376, %v377
    %v380 = vadd.f32 %v368, %v378
    %s381 = sadd.s32 %s363, 2
    %s382 = sld [smem:[#allocation2 + %s381]]
    %v383 = vstv %s382
    %v384 = vmul.f32 %v383, %v371
    %386 = vrot.lane.b32.xlu0 %v384, 126
    %v387 = vpop.permute.xlu0 %386
    %v388 = vrot.slane %v387, 2
    %v389 = vsel %vm80, %v387, %v388
    %v391 = vadd.f32 %v380, %v389
    %s392 = sadd.s32 %s363, 3
    %s393 = sld [smem:[#allocation2 + %s392]]
    %v394 = vstv %s393
    %v395 = vmul.f32 %v394, %v371
    %397 = vrot.lane.b32.xlu0 %v395, 110
    %v398 = vpop.permute.xlu0 %397
    %v399 = vrot.slane %v398, 2
    %v400 = vsel %vm92, %v398, %v399
    %v402 = vadd.f32 %v391, %v400
    %s403 = sadd.s32 %s363, 4
    %s404 = sld [smem:[#allocation2 + %s403]]
    %v405 = vstv %s404
    %v406 = vmul.f32 %v405, %v371
    %408 = vrot.lane.b32.xlu0 %v406, 109
    %v409 = vpop.permute.xlu0 %408
    %v410 = vrot.slane %v409, 2
    %v411 = vsel %vm104, %v409, %v410
    %v413 = vadd.f32 %v402, %v411
    %s414 = sadd.s32 %s363, 5
    %s415 = sld [smem:[#allocation2 + %s414]]
    %v416 = vstv %s415
    %v417 = vmul.f32 %v416, %v371
    %419 = vrot.lane.b32.xlu0 %v417, 108
    %v420 = vpop.permute.xlu0 %419
    %v421 = vrot.slane %v420, 2
    %v422 = vsel %vm116, %v420, %v421
    %v424 = vadd.f32 %v413, %v422
    %s425 = sadd.s32 %s363, 6
    %s426 = sld [smem:[#allocation2 + %s425]]
    %v427 = vstv %s426
    %v428 = vmul.f32 %v427, %v371
    %430 = vrot.lane.b32.xlu0 %v428, 92
    %v431 = vpop.permute.xlu0 %430
    %v432 = vrot.slane %v431, 2
    %v433 = vsel %vm128, %v431, %v432
    %v435 = vadd.f32 %v424, %v433
    %s436 = sadd.s32 %s363, 7
    %s437 = sld [smem:[#allocation2 + %s436]]
    %v438 = vstv %s437
    %v439 = vmul.f32 %v438, %v371
    %441 = vrot.lane.b32.xlu0 %v439, 91
    %v442 = vpop.permute.xlu0 %441
    %v443 = vrot.slane %v442, 2
    %v444 = vsel %vm140, %v442, %v443
    %v446 = vadd.f32 %v435, %v444
    %s447 = sadd.s32 %s363, 8
    %s448 = sld [smem:[#allocation2 + %s447]]
    %v449 = vstv %s448
    %v450 = vmul.f32 %v449, %v371
    %452 = vrot.lane.b32.xlu0 %v450, 90
    %v453 = vpop.permute.xlu0 %452
    %v454 = vrot.slane %v453, 2
    %v455 = vsel %vm152, %v453, %v454
    %v457 = vadd.f32 %v446, %v455
    %v458 = vmax.f32 %v457, 0.0
    %s459 = scalar_lea.vmem [#allocation9], 18
    %460 = vst [vmem:[%s459] sm:$0x3f] %v458
    // Predicated region
    $region26: #{tpu_custom_call.1} parent=1 // pred_check
      _
    $region27: #{tpu_custom_call.1} parent=1 // pred_check_branch
      %462 = sbr.rel (0) target = $region29
    $region28: #{tpu_custom_call.1} parent=1 // pred_region
      %s464 = ssub.s32 384, 384
      %465 = vsyncadd [#allocation4], %s464
      %s466 = sshll.u32 [#allocation9], 4
      %s467 = int_to_ptr.vmem [resolvable:$true] %s466
      %472 = dma.vmem_to_hbm [thread:$0]  %s467, 384, %s3, [#allocation4], 96, 96, 6
    $region29: #{tpu_custom_call.1} parent=1 // pred_fallthru
      _
    // Predicated region
    $region30: #{tpu_custom_call.1} parent=1 // pred_check
      _
    $region31: #{tpu_custom_call.1} parent=1 // pred_check_branch
      %474 = sbr.rel (0) target = $region33
    $region32: #{tpu_custom_call.1} parent=1 // pred_region
      %475 = dma.done [#allocation4], 384
    $region33: #{tpu_custom_call.1} parent=1 // pred_fallthru
      _
    %476 = vsyncpa [#allocation3], 1
    %477 = vsyncpa [#allocation4], 1
    %478 = vsyncpa [#allocation5], 1
    %479 = vsyncpa [#allocation6], 1

</llo_original>
